<compile_context>
chip_gen: v7x
topology: tpu7x:2x2x1
jax: 0.10.0
libtpu: 0.0.40
codegen_flags: <defaults>
</compile_context>

<pallas_src>
import jax
import jax.numpy as jnp
from jax.experimental import pallas as pl
from jax.experimental.pallas import tpu as pltpu


def _round_up(x, m):
    return (x + m - 1) // m * m


# --------------------------------------------------------------------------
# Kernel 1: one-shot weight prep.
#   wn = 10 * W / max(||W[:, j]||_2, 1e-12)   (per column j), cast for the MXU.
# Normalization math stays in f32 (v5e VPU/EUP have no bf16).
# --------------------------------------------------------------------------
def _prep_weight_kernel(w_ref, wn_ref):
    w = w_ref[...].astype(jnp.float32)                       # (D_pad, C_pad)
    col_sumsq = jnp.sum(w * w, axis=0, keepdims=True)        # (1, C_pad)
    # rsqrt(max(sumsq, eps^2)) == 1 / max(||col||, eps)  with eps = 1e-12
    inv = jax.lax.rsqrt(jnp.maximum(col_sumsq, 1e-24))
    wn_ref[...] = (10.0 * w * inv).astype(wn_ref.dtype)


# --------------------------------------------------------------------------
# Kernel 2: row-tiled NormedLinear.
#   For each (TM, D_pad) tile of x: row-normalize in f32 (fused rsqrt), then
#   a single MXU matmul with the prepped (bf16) weight, f32 accumulation.
# --------------------------------------------------------------------------
def _normed_linear_kernel(x_ref, w_ref, out_ref):
    x = x_ref[...].astype(jnp.float32)                       # (TM, D_pad)
    sumsq = jnp.sum(x * x, axis=1, keepdims=True)            # (TM, 1)
    xn = x * jax.lax.rsqrt(jnp.maximum(sumsq, 1e-24))        # F.normalize(x, dim=1)
    out_ref[...] = jnp.dot(
        xn.astype(w_ref.dtype), w_ref[...],
        preferred_element_type=jnp.float32,
    ).astype(out_ref.dtype)


def normed_linear_forward(x, weight, *, block_m=256, matmul_dtype=jnp.bfloat16):
    """x: (N, in_features) f32, weight: (in_features, out_features) f32.
    Returns (N, out_features) f32, matching the PyTorch forward."""
    N, D = x.shape
    D_w, C = weight.shape
    assert D == D_w, "weight must be (in_features, out_features)"

    # Lane-dense padding: feature/class dims -> multiples of 128, rows -> tile.
    D_pad = _round_up(D, 128)
    C_pad = _round_up(C, 128)
    tm = min(block_m, _round_up(N, 8))
    N_pad = _round_up(N, tm)

    x_p = jnp.zeros((N_pad, D_pad), jnp.float32).at[:N, :D].set(
        x.astype(jnp.float32))
    w_p = jnp.zeros((D_pad, C_pad), jnp.float32).at[:D, :C].set(
        weight.astype(jnp.float32))

    # ---- 1) one-shot weight prep (hoisted out of the per-row-tile path) ----
    w_prepped = pl.pallas_call(
        _prep_weight_kernel,
        out_shape=jax.ShapeDtypeStruct((D_pad, C_pad), matmul_dtype),
        in_specs=[pl.BlockSpec((D_pad, C_pad), lambda: (0, 0))],
        out_specs=pl.BlockSpec((D_pad, C_pad), lambda: (0, 0)),
    )(w_p)

    # ---- 2) row-tiled main kernel ----
    grid = (N_pad // tm,)
    # VMEM budget: double-buffered x tile + resident weight + output tile,
    # with generous headroom; clamped so it is valid on all generations
    # (v5e 16 MiB default scoped, v7x 64 MiB physical per TC).
    est = (2 * tm * D_pad * 4            # x tiles (f32, double-buffered)
           + 2 * D_pad * C_pad * 2       # weight (bf16)
           + 2 * tm * C_pad * 4)         # output tiles (f32)
    vmem_limit = min(max(4 * est, 16 * 1024 * 1024), 64 * 1024 * 1024)

    out_p = pl.pallas_call(
        _normed_linear_kernel,
        out_shape=jax.ShapeDtypeStruct((N_pad, C_pad), jnp.float32),
        grid_spec=pltpu.PrefetchScalarGridSpec(
            num_scalar_prefetch=0,
            grid=grid,
            in_specs=[
                pl.BlockSpec((tm, D_pad), lambda i: (i, 0)),   # streamed x tiles
                pl.BlockSpec((D_pad, C_pad), lambda i: (0, 0)),  # resident weight
            ],
            out_specs=pl.BlockSpec((tm, C_pad), lambda i: (i, 0)),
        ),
        compiler_params=pltpu.CompilerParams(
            dimension_semantics=("parallel",),   # v7x: split row tiles across 2 TCs
            vmem_limit_bytes=vmem_limit,
        ),
    )(x_p, w_prepped)

    return out_p[:N, :C]


def _reference(x, weight):
    xn = x / jnp.maximum(
        jnp.sqrt(jnp.sum(x * x, axis=1, keepdims=True)), 1e-12)
    wn = weight / jnp.maximum(
        jnp.sqrt(jnp.sum(weight * weight, axis=0, keepdims=True)), 1e-12)
    return 10.0 * (xn @ wn)


def init_weight(key, in_features, out_features):
    # Matches forward-relevant init: uniform(-1, 1).  The renorm_(2,1,1e-5)
    # .mul_(1e5) in __init__ only rescales columns, which the forward's
    # column normalization cancels anyway.
    return jax.random.uniform(key, (in_features, out_features),
                              jnp.float32, -1.0, 1.0)


if __name__ == "__main__":
    key = jax.random.PRNGKey(0)
    N, in_features, out_features = 16, 32, 10

    kx, kw = jax.random.split(key, 2)
    x = jax.random.normal(kx, (N, in_features), jnp.float32)
    weight = init_weight(kw, in_features, out_features)

    out = normed_linear_forward(x, weight)
    jax.block_until_ready(out)

    assert out.shape == (N, out_features)
    ref = _reference(x, weight)
    err = float(jnp.max(jnp.abs(out - ref)))
    # bf16 MXU operands with f32 accumulation -> relaxed tolerance.
    assert err < 0.15, f"max abs error {err} too large"
    print("KERNEL_OK")
</pallas_src>

<mosaic_0001>
module attributes {stable_mosaic.version = 11 : i64} {
  func.func @_prep_weight_kernel(%arg0: memref<128x128xf32, #tpu.memory_space<vmem>>, %arg1: memref<128x128xbf16, #tpu.memory_space<vmem>>) attributes {dimension_semantics = [], scalar_prefetch = 0 : i64, scratch_operands = 0 : i64, tpu.core_type = #tpu.core_type<tc>} {
    %c0 = arith.constant 0 : index
    %c0_0 = arith.constant 0 : index
    %0 = vector.load %arg0[%c0, %c0_0] : memref<128x128xf32, #tpu.memory_space<vmem>>, vector<128x128xf32>
    %1 = arith.mulf %0, %0 : vector<128x128xf32>
    %cst = arith.constant dense<0.000000e+00> : vector<128xf32>
    %2 = vector.multi_reduction <add>, %1, %cst [0] : vector<128x128xf32> to vector<128xf32>
    %3 = vector.shape_cast %2 : vector<128xf32> to vector<1x128xf32>
    %cst_1 = arith.constant 1.000000e-24 : f32
    %4 = vector.broadcast %cst_1 : f32 to vector<1x128xf32>
    %5 = arith.maximumf %3, %4 : vector<1x128xf32>
    %6 = math.rsqrt %5 : vector<1x128xf32>
    %cst_2 = arith.constant 1.000000e+01 : f32
    %7 = vector.broadcast %cst_2 : f32 to vector<128x128xf32>
    %8 = arith.mulf %7, %0 : vector<128x128xf32>
    %9 = vector.broadcast %6 : vector<1x128xf32> to vector<128x128xf32>
    %10 = arith.mulf %8, %9 : vector<128x128xf32>
    %11 = arith.truncf %10 : vector<128x128xf32> to vector<128x128xbf16>
    %c0_3 = arith.constant 0 : index
    %c0_4 = arith.constant 0 : index
    %12 = vector.load %arg1[%c0_3, %c0_4] : memref<128x128xbf16, #tpu.memory_space<vmem>>, vector<128x128xbf16>
    tpu.vector_store %arg1[%c0_3, %c0_4], %11 {strides = array<i32>} : memref<128x128xbf16, #tpu.memory_space<vmem>>, vector<128x128xbf16>,
    return
  }
}

</mosaic_0001>

<llo_original>
// kernel: tpu_custom_call.1
$region0: #{tpu_custom_call.1}
  #allocation0 [shape = 'u32[]', space=smem, size = 0x4, offset = 0x4, fixed_abs, tag = 'smem constant byte address 0x4 - core index']
  #allocation1 [shape = 'u32[144,128]{1,0:T(1,128)}', space=vmem, size = 0x12000, scoped, tag = 'internal scratch']
  %s0 = inlined_call_operand.hbm [shape: f32[128,128], index: 0, kind: input, shape index: {}]
  %s1 = inlined_call_operand.hbm [shape: bf16[128,128], index: 1, kind: output, shape index: {}]
  %s2 = sld [smem:[#allocation0]]
  $region18: #{tpu_custom_call.1} parent=0
    _
  %s4 = ssub.s32 1, %s2
  %s5 = scalar_select 0, %s4, %s2
  $region1: #{tpu_custom_call.1} parent=0
    #allocation2 [shape = 'u8[65536]{0}', space=vmem, size = 0x10000, scoped, tag = 'input window, operand 0, single buffered']
    #allocation3 [shape = 's32[1]{0}', space=sflag, size = 0x4, scoped, tag = 'scoped memory for tpu_custom_call.1']
    #allocation4 [shape = 's32[1]{0}', space=sflag, size = 0x4, scoped, tag = 'scoped memory for tpu_custom_call.1']
    #allocation5 [shape = 'u8[32768]{0}', space=vmem, size = 0x8000, scoped, tag = 'output window, operand 0, single buffered']
    %6 = vsyncpa [#allocation3], 0
    %7 = vsyncpa [#allocation4], 0
    // Predicated region
    $region2: #{tpu_custom_call.1} parent=1 // pred_check
      _
    $region3: #{tpu_custom_call.1} parent=1 // pred_check_branch
      %9 = sbr.rel (0) target = $region5
    $region4: #{tpu_custom_call.1} parent=1 // pred_region
      %s11 = ssub.s32 2048, 2048
      %12 = vsyncadd [#allocation3], %s11
      %s13 = sshll.u32 [#allocation2], 4
      %s14 = int_to_ptr.vmem [resolvable:$true] %s13
      %19 = dma.hbm_to_vmem [thread:$0]  %s0, 2048, %s14, [#allocation3], 128, 128, 8
    $region5: #{tpu_custom_call.1} parent=1 // pred_fallthru
      _
    // Predicated region
    $region6: #{tpu_custom_call.1} parent=1 // pred_check
      _
    $region7: #{tpu_custom_call.1} parent=1 // pred_check_branch
      %21 = sbr.rel (0) target = $region9
    $region8: #{tpu_custom_call.1} parent=1 // pred_region
      %22 = dma.done [#allocation3], 2048
    $region9: #{tpu_custom_call.1} parent=1 // pred_fallthru
      _
    %v23 = vld [vmem:[#allocation2] sm:$0xff]
    %v24 = vld [vmem:[#allocation2 + $0x8] sm:$0xff]
    %v25 = vld [vmem:[#allocation2 + $0x10] sm:$0xff]
    %v26 = vld [vmem:[#allocation2 + $0x18] sm:$0xff]
    %v27 = vld [vmem:[#allocation2 + $0x20] sm:$0xff]
    %v28 = vld [vmem:[#allocation2 + $0x28] sm:$0xff]
    %v29 = vld [vmem:[#allocation2 + $0x30] sm:$0xff]
    %v30 = vld [vmem:[#allocation2 + $0x38] sm:$0xff]
    %v31 = vld [vmem:[#allocation2 + $0x40] sm:$0xff]
    %v32 = vld [vmem:[#allocation2 + $0x48] sm:$0xff]
    %v33 = vld [vmem:[#allocation2 + $0x50] sm:$0xff]
    %v34 = vld [vmem:[#allocation2 + $0x58] sm:$0xff]
    %v35 = vld [vmem:[#allocation2 + $0x60] sm:$0xff]
    %v36 = vld [vmem:[#allocation2 + $0x68] sm:$0xff]
    %v37 = vld [vmem:[#allocation2 + $0x70] sm:$0xff]
    %v38 = vld [vmem:[#allocation2 + $0x78] sm:$0xff]
    %v39 = vmul.f32 %v23, %v23
    %v40 = vmul.f32 %v24, %v24
    %v41 = vmul.f32 %v25, %v25
    %v42 = vmul.f32 %v26, %v26
    %v43 = vmul.f32 %v27, %v27
    %v44 = vmul.f32 %v28, %v28
    %v45 = vmul.f32 %v29, %v29
    %v46 = vmul.f32 %v30, %v30
    %v47 = vmul.f32 %v31, %v31
    %v48 = vmul.f32 %v32, %v32
    %v49 = vmul.f32 %v33, %v33
    %v50 = vmul.f32 %v34, %v34
    %v51 = vmul.f32 %v35, %v35
    %v52 = vmul.f32 %v36, %v36
    %v53 = vmul.f32 %v37, %v37
    %v54 = vmul.f32 %v38, %v38
    %v55 = vadd.f32 %v39, %v40
    %v56 = vadd.f32 %v55, %v41
    %v57 = vadd.f32 %v56, %v42
    %v58 = vadd.f32 %v57, %v43
    %v59 = vadd.f32 %v58, %v44
    %v60 = vadd.f32 %v59, %v45
    %v61 = vadd.f32 %v60, %v46
    %v62 = vadd.f32 %v61, %v47
    %v63 = vadd.f32 %v62, %v48
    %v64 = vadd.f32 %v63, %v49
    %v65 = vadd.f32 %v64, %v50
    %v66 = vadd.f32 %v65, %v51
    %v67 = vadd.f32 %v66, %v52
    %v68 = vadd.f32 %v67, %v53
    %v69 = vadd.f32 %v68, %v54
    %v70 = vrot.slane %v69, 4
    %v71 = vadd.f32 %v69, %v70
    %v72 = vrot.slane %v71, 2
    %v73 = vadd.f32 %v71, %v72
    %v74 = vrot.slane %v73, 1
    %v75 = vadd.f32 %v73, %v74
    %v76 = vmax.f32 %v75, 1e-24
    %v77 = vrsqrt.pop %v76
    %v78 = vmul.f32 %v23, 10.0
    %v79 = vmul.f32 %v24, 10.0
    %v80 = vmul.f32 %v25, 10.0
    %v81 = vmul.f32 %v26, 10.0
    %v82 = vmul.f32 %v27, 10.0
    %v83 = vmul.f32 %v28, 10.0
    %v84 = vmul.f32 %v29, 10.0
    %v85 = vmul.f32 %v30, 10.0
    %v86 = vmul.f32 %v31, 10.0
    %v87 = vmul.f32 %v32, 10.0
    %v88 = vmul.f32 %v33, 10.0
    %v89 = vmul.f32 %v34, 10.0
    %v90 = vmul.f32 %v35, 10.0
    %v91 = vmul.f32 %v36, 10.0
    %v92 = vmul.f32 %v37, 10.0
    %v93 = vmul.f32 %v38, 10.0
    %v94 = vmul.f32 %v78, %v77
    %v95 = vmul.f32 %v79, %v77
    %v96 = vmul.f32 %v80, %v77
    %v97 = vmul.f32 %v81, %v77
    %v98 = vmul.f32 %v82, %v77
    %v99 = vmul.f32 %v83, %v77
    %v100 = vmul.f32 %v84, %v77
    %v101 = vmul.f32 %v85, %v77
    %v102 = vmul.f32 %v86, %v77
    %v103 = vmul.f32 %v87, %v77
    %v104 = vmul.f32 %v88, %v77
    %v105 = vmul.f32 %v89, %v77
    %v106 = vmul.f32 %v90, %v77
    %v107 = vmul.f32 %v91, %v77
    %v108 = vmul.f32 %v92, %v77
    %v109 = vmul.f32 %v93, %v77
    %v110 = vpack.c.bf16 %v95, %v94
    %v111 = vpack.c.bf16 %v97, %v96
    %v112 = vpack.c.bf16 %v99, %v98
    %v113 = vpack.c.bf16 %v101, %v100
    %v114 = vpack.c.bf16 %v103, %v102
    %v115 = vpack.c.bf16 %v105, %v104
    %v116 = vpack.c.bf16 %v107, %v106
    %v117 = vpack.c.bf16 %v109, %v108
    %v126 = vunpack.c.l.b16 %v110
    %v127 = vunpack.c.h.b16 %v110
    %v128 = vunpack.c.l.b16 %v111
    %v129 = vunpack.c.h.b16 %v111
    %v130 = vunpack.c.l.b16 %v112
    %v131 = vunpack.c.h.b16 %v112
    %v132 = vunpack.c.l.b16 %v113
    %v133 = vunpack.c.h.b16 %v113
    %v134 = vunpack.c.l.b16 %v114
    %v135 = vunpack.c.h.b16 %v114
    %v136 = vunpack.c.l.b16 %v115
    %v137 = vunpack.c.h.b16 %v115
    %v138 = vunpack.c.l.b16 %v116
    %v139 = vunpack.c.h.b16 %v116
    %v140 = vunpack.c.l.b16 %v117
    %v141 = vunpack.c.h.b16 %v117
    %v142 = vpack.c.b16 %v126, %v126
    %v143 = vpack.c.b16 %v127, %v127
    %v144 = vpack.c.b16 %v128, %v128
    %v145 = vpack.c.b16 %v129, %v129
    %v146 = vpack.c.b16 %v130, %v130
    %v147 = vpack.c.b16 %v131, %v131
    %v148 = vpack.c.b16 %v132, %v132
    %v149 = vpack.c.b16 %v133, %v133
    %v150 = vpack.c.b16 %v134, %v134
    %v151 = vpack.c.b16 %v135, %v135
    %v152 = vpack.c.b16 %v136, %v136
    %v153 = vpack.c.b16 %v137, %v137
    %v154 = vpack.c.b16 %v138, %v138
    %v155 = vpack.c.b16 %v139, %v139
    %v156 = vpack.c.b16 %v140, %v140
    %v157 = vpack.c.b16 %v141, %v141
    %174 = vst [vmem:[#allocation5] sm:$0xf] %v142
    %175 = vst [vmem:[#allocation5 + $0x4] sm:$0xf] %v143
    %176 = vst [vmem:[#allocation5 + $0x8] sm:$0xf] %v144
    %177 = vst [vmem:[#allocation5 + $0xc] sm:$0xf] %v145
    %178 = vst [vmem:[#allocation5 + $0x10] sm:$0xf] %v146
    %179 = vst [vmem:[#allocation5 + $0x14] sm:$0xf] %v147
    %180 = vst [vmem:[#allocation5 + $0x18] sm:$0xf] %v148
    %181 = vst [vmem:[#allocation5 + $0x1c] sm:$0xf] %v149
    %182 = vst [vmem:[#allocation5 + $0x20] sm:$0xf] %v150
    %183 = vst [vmem:[#allocation5 + $0x24] sm:$0xf] %v151
    %184 = vst [vmem:[#allocation5 + $0x28] sm:$0xf] %v152
    %185 = vst [vmem:[#allocation5 + $0x2c] sm:$0xf] %v153
    %186 = vst [vmem:[#allocation5 + $0x30] sm:$0xf] %v154
    %187 = vst [vmem:[#allocation5 + $0x34] sm:$0xf] %v155
    %188 = vst [vmem:[#allocation5 + $0x38] sm:$0xf] %v156
    %189 = vst [vmem:[#allocation5 + $0x3c] sm:$0xf] %v157
    // Predicated region
    $region10: #{tpu_custom_call.1} parent=1 // pred_check
      _
    $region11: #{tpu_custom_call.1} parent=1 // pred_check_branch
      %191 = sbr.rel (0) target = $region13
    $region12: #{tpu_custom_call.1} parent=1 // pred_region
      %s193 = ssub.s32 1024, 1024
      %194 = vsyncadd [#allocation4], %s193
      %s195 = sshll.u32 [#allocation5], 4
      %s196 = int_to_ptr.vmem [resolvable:$true] %s195
      %201 = dma.vmem_to_hbm [thread:$0]  %s196, 1024, %s1, [#allocation4], 64, 64, 4
    $region13: #{tpu_custom_call.1} parent=1 // pred_fallthru
      _
    // Predicated region
    $region14: #{tpu_custom_call.1} parent=1 // pred_check
      _
    $region15: #{tpu_custom_call.1} parent=1 // pred_check_branch
      %203 = sbr.rel (0) target = $region17
    $region16: #{tpu_custom_call.1} parent=1 // pred_region
      %204 = dma.done [#allocation4], 1024
    $region17: #{tpu_custom_call.1} parent=1 // pred_fallthru
      _
    %205 = vsyncpa [#allocation3], 1
    %206 = vsyncpa [#allocation4], 1

</llo_original>
